<compile_context>
chip_gen: v7x
topology: tpu7x:2x2x1
jax: 0.10.0
libtpu: 0.0.40
codegen_flags: <defaults>
</compile_context>

<pallas_src>
import functools

import jax
import jax.numpy as jnp
from jax.experimental import pallas as pl
from jax.experimental.pallas import tpu as pltpu


def _channel_attention_kernel(x_ref, w1_ref, w2_ref, o_ref, *, hw_real, hw_pad):
    # x_ref : (bb, C, HWp)  block of batch elements (HW possibly zero-padded)
    # w1_ref: (CR, C)       fc1 weight (out_features, in_features), no bias
    # w2_ref: (C, CR)       fc2 weight (out_features, in_features), no bias
    x = x_ref[...]                                   # (bb, C, HWp) f32
    w1 = w1_ref[...]                                 # (CR, C)
    w2 = w2_ref[...]                                 # (C, CR)
    bb = x.shape[0]

    # Global spatial pooling (AdaptiveMaxPool2d(1) / AdaptiveAvgPool2d(1)).
    if hw_pad != hw_real:
        # Padded lanes: exclude from max (use -inf) and from mean (divide by
        # the real HW; zero padding does not perturb the sum).
        lane = jax.lax.broadcasted_iota(jnp.int32, x.shape, dimension=2)
        valid = lane < hw_real
        max_pool = jnp.max(jnp.where(valid, x, -jnp.inf), axis=2)      # (bb, C)
        avg_pool = jnp.sum(x, axis=2) / jnp.float32(hw_real)           # (bb, C)
    else:
        max_pool = jnp.max(x, axis=2)                                  # (bb, C)
        avg_pool = jnp.mean(x, axis=2)                                 # (bb, C)

    # Fused shared MLP: stack both pooled matrices -> one pair of matmuls.
    pooled = jnp.concatenate([max_pool, avg_pool], axis=0)             # (2*bb, C)

    # fc1: contract over C  -> (2*bb, CR); relu on VPU.
    h = jax.lax.dot_general(pooled, w1, (((1,), (1,)), ((), ())),
                            preferred_element_type=jnp.float32)
    h = jnp.maximum(h, 0.0)

    # fc2: contract over CR -> (2*bb, C).
    o = jax.lax.dot_general(h, w2, (((1,), (1,)), ((), ())),
                            preferred_element_type=jnp.float32)

    scale = jax.nn.sigmoid(o[:bb] + o[bb:])                            # (bb, C)

    # Rescale the whole block (padded lanes produce 0*scale, sliced off later).
    o_ref[...] = (x * scale[:, :, None]).astype(o_ref.dtype)


def _choose_batch_block(b, per_elem_bytes, lo=512 << 10, hi=4 << 20):
    """Largest divisor of b whose block stays <= hi; stop once block >= lo."""
    bb = 1
    for cand in range(1, b + 1):
        if b % cand:
            continue
        if cand * per_elem_bytes <= hi:
            bb = cand
        if cand * per_elem_bytes >= lo:
            break
    return bb


def channel_attention(x_nchw, w_fc1, w_fc2):
    """x_nchw: (B, C, H, W) float32; w_fc1: (C//ratio, C); w_fc2: (C, C//ratio)."""
    b, c, h, w = x_nchw.shape
    cr = w_fc1.shape[0]
    hw = h * w
    # Lane-dense trailing dim: pad HW up to a multiple of 128.
    hw_pad = max(128, ((hw + 127) // 128) * 128)

    x = x_nchw.reshape(b, c, hw)
    if hw_pad != hw:
        x = jnp.pad(x, ((0, 0), (0, 0), (0, hw_pad - hw)))

    itemsize = x.dtype.itemsize
    per_elem_bytes = c * hw_pad * itemsize
    bb = _choose_batch_block(b, per_elem_bytes)
    grid_b = b // bb
    # TODO(synk): for very large C*HW (per-element block > ~8 MiB, e.g. v7x
    # with its 64 MiB VMEM) add an HW grid axis and go two-pass
    # (pass 0: running max/sum into scratch; pass 1: apply scale).

    kernel = functools.partial(_channel_attention_kernel,
                               hw_real=hw, hw_pad=hw_pad)

    weight_bytes = (w_fc1.size + w_fc2.size) * 4
    block_bytes = bb * per_elem_bytes
    # Double-buffered input + output blocks, weights, plus headroom.
    needed_vmem = 4 * block_bytes + 2 * weight_bytes + (2 << 20)
    compiler_kwargs = dict(dimension_semantics=("parallel",))
    if needed_vmem > (32 << 20):
        # Raise the scoped VMEM limit only when the working set requires it
        # (v5e default 16 MiB, v6e/v7x 32 MiB). Cap well below v5e/v6e physical.
        compiler_kwargs["vmem_limit_bytes"] = min(needed_vmem, 100 << 20)

    cost = pl.CostEstimate(
        flops=3 * b * c * hw + 4 * b * c * cr,       # pooling + rescale + MLP
        transcendentals=b * c,                       # sigmoid
        bytes_accessed=2 * b * c * hw_pad * itemsize + weight_bytes,
    )

    out = pl.pallas_call(
        kernel,
        out_shape=jax.ShapeDtypeStruct((b, c, hw_pad), x.dtype),
        grid_spec=pltpu.PrefetchScalarGridSpec(
            num_scalar_prefetch=0,
            grid=(grid_b,),
            in_specs=[
                # bb batch elements per grid step; block covers full (C, HWp).
                pl.BlockSpec((bb, c, hw_pad), lambda i: (i, 0, 0)),
                # full weight matrices, same block every step
                pl.BlockSpec((cr, c), lambda i: (0, 0)),
                pl.BlockSpec((c, cr), lambda i: (0, 0)),
            ],
            out_specs=pl.BlockSpec((bb, c, hw_pad), lambda i: (i, 0, 0)),
        ),
        compiler_params=pltpu.CompilerParams(**compiler_kwargs),
        cost_estimate=cost,
    )(x, w_fc1, w_fc2)

    if hw_pad != hw:
        out = out[:, :, :hw]
    return out.reshape(b, c, h, w)


def reference(x_nchw, w_fc1, w_fc2):
    """Pure-JAX reference matching the PyTorch forward."""
    b, c, h, w = x_nchw.shape
    max_pool = jnp.max(x_nchw, axis=(2, 3))          # (B, C)
    avg_pool = jnp.mean(x_nchw, axis=(2, 3))         # (B, C)
    xm = jnp.maximum(max_pool @ w_fc1.T, 0.0) @ w_fc2.T
    xa = jnp.maximum(avg_pool @ w_fc1.T, 0.0) @ w_fc2.T
    s = jax.nn.sigmoid(xm + xa).reshape(b, c, 1, 1)
    return x_nchw * s


if __name__ == "__main__":
    key = jax.random.PRNGKey(0)
    k_x, k_w1, k_w2 = jax.random.split(key, 3)

    B, C, H, W = 2, 4, 16, 16
    ratio = 4
    CR = C // ratio

    x = jax.random.normal(k_x, (B, C, H, W), dtype=jnp.float32)
    # Deterministic synthetic weights (nn.Linear: (out_features, in_features), no bias).
    w_fc1 = jax.random.normal(k_w1, (CR, C), dtype=jnp.float32) * 0.1
    w_fc2 = jax.random.normal(k_w2, (C, CR), dtype=jnp.float32) * 0.1

    out = channel_attention(x, w_fc1, w_fc2)
    out = jax.block_until_ready(out)

    ref = reference(x, w_fc1, w_fc2)
    assert out.shape == (B, C, H, W)
    assert jnp.allclose(out, ref, atol=1e-5, rtol=1e-5), "mismatch vs reference"

    print("KERNEL_OK")
</pallas_src>

<mosaic_0001>
module attributes {stable_mosaic.version = 11 : i64} {
  func.func @_channel_attention_kernel(%arg0: i32, %arg1: memref<2x4x256xf32, #tpu.memory_space<vmem>>, %arg2: memref<1x4xf32, #tpu.memory_space<vmem>>, %arg3: memref<4x1xf32, #tpu.memory_space<vmem>>, %arg4: memref<2x4x256xf32, #tpu.memory_space<vmem>>) attributes {dimension_semantics = [#tpu.dimension_semantics<parallel>], iteration_bounds = array<i64: 1>, scalar_prefetch = 0 : i64, scratch_operands = 0 : i64, tpu.core_type = #tpu.core_type<tc>, window_params = [{transform_indices = @transform_0, window_bounds = array<i64: 2, 4, 256>}, {pipeline_mode = #tpu.pipeline_mode<synchronous>, transform_indices = @transform_1, window_bounds = array<i64: 1, 4>}, {pipeline_mode = #tpu.pipeline_mode<synchronous>, transform_indices = @transform_2, window_bounds = array<i64: 4, 1>}, {transform_indices = @transform_3, window_bounds = array<i64: 2, 4, 256>}]} {
    %c0 = arith.constant 0 : index
    %c0_0 = arith.constant 0 : index
    %c0_1 = arith.constant 0 : index
    %0 = vector.load %arg1[%c0, %c0_0, %c0_1] : memref<2x4x256xf32, #tpu.memory_space<vmem>>, vector<2x4x256xf32>
    %c0_2 = arith.constant 0 : index
    %c0_3 = arith.constant 0 : index
    %1 = vector.load %arg2[%c0_2, %c0_3] : memref<1x4xf32, #tpu.memory_space<vmem>>, vector<1x4xf32>
    %c0_4 = arith.constant 0 : index
    %c0_5 = arith.constant 0 : index
    %2 = vector.load %arg3[%c0_4, %c0_5] : memref<4x1xf32, #tpu.memory_space<vmem>>, vector<4x1xf32>
    %cst = arith.constant dense<0xFF800000> : vector<2x4xf32>
    %3 = vector.multi_reduction <maximumf>, %0, %cst [2] : vector<2x4x256xf32> to vector<2x4xf32>
    %cst_6 = arith.constant dense<0.000000e+00> : vector<2x4xf32>
    %4 = vector.multi_reduction <add>, %0, %cst_6 [2] : vector<2x4x256xf32> to vector<2x4xf32>
    %cst_7 = arith.constant 2.560000e+02 : f32
    %5 = vector.broadcast %cst_7 : f32 to vector<2x4xf32>
    %6 = arith.divf %4, %5 : vector<2x4xf32>
    %7 = tpu.concatenate %3, %6 in 0 : vector<2x4xf32>, vector<2x4xf32> -> vector<4x4xf32>
    %cst_8 = arith.constant dense<0.000000e+00> : vector<4x1xf32>
    %8 = tpu.matmul %7, %1, %cst_8 {dimension_numbers = #tpu.dot_dimension_numbers<[1], [1], [0], [0], [0, 0, 1, 0], [], []>} : vector<4x4xf32>, vector<1x4xf32>, vector<4x1xf32> -> vector<4x1xf32>
    %cst_9 = arith.constant 0.000000e+00 : f32
    %9 = vector.broadcast %cst_9 : f32 to vector<4x1xf32>
    %10 = arith.maximumf %8, %9 : vector<4x1xf32>
    %cst_10 = arith.constant dense<0.000000e+00> : vector<4x4xf32>
    %11 = tpu.matmul %10, %2, %cst_10 {dimension_numbers = #tpu.dot_dimension_numbers<[1], [1], [0], [0], [0, 0, 1, 0], [], []>} : vector<4x1xf32>, vector<4x1xf32>, vector<4x4xf32> -> vector<4x4xf32>
    %12 = vector.extract_strided_slice %11 {offsets = [0, 0], sizes = [2, 4], strides = [1, 1]} : vector<4x4xf32> to vector<2x4xf32>
    %13 = vector.extract_strided_slice %11 {offsets = [2, 0], sizes = [2, 4], strides = [1, 1]} : vector<4x4xf32> to vector<2x4xf32>
    %14 = arith.addf %12, %13 : vector<2x4xf32>
    %15 = arith.negf %14 : vector<2x4xf32>
    %16 = math.exp %15 : vector<2x4xf32>
    %cst_11 = arith.constant 1.000000e+00 : f32
    %17 = vector.broadcast %cst_11 : f32 to vector<2x4xf32>
    %18 = arith.addf %17, %16 : vector<2x4xf32>
    %19 = arith.divf %17, %18 : vector<2x4xf32>
    %20 = vector.shape_cast %19 : vector<2x4xf32> to vector<2x4x1xf32>
    %21 = vector.broadcast %20 : vector<2x4x1xf32> to vector<2x4x256xf32>
    %22 = arith.mulf %0, %21 : vector<2x4x256xf32>
    %c0_12 = arith.constant 0 : index
    %c0_13 = arith.constant 0 : index
    %c0_14 = arith.constant 0 : index
    %23 = vector.load %arg4[%c0_12, %c0_13, %c0_14] : memref<2x4x256xf32, #tpu.memory_space<vmem>>, vector<2x4x256xf32>
    tpu.vector_store %arg4[%c0_12, %c0_13, %c0_14], %22 {strides = array<i32>} : memref<2x4x256xf32, #tpu.memory_space<vmem>>, vector<2x4x256xf32>,
    return
  }
  func.func @transform_0(%arg0: i32) -> (i32, i32, i32) {
    %c0_i32 = arith.constant 0 : i32
    %c0_i32_0 = arith.constant 0 : i32
    %c0_i32_1 = arith.constant 0 : i32
    return %arg0, %c0_i32, %c0_i32_0 : i32, i32, i32
  }
  func.func @transform_1(%arg0: i32) -> (i32, i32) {
    %c0_i32 = arith.constant 0 : i32
    %c0_i32_0 = arith.constant 0 : i32
    %c0_i32_1 = arith.constant 0 : i32
    return %c0_i32, %c0_i32_0 : i32, i32
  }
  func.func @transform_2(%arg0: i32) -> (i32, i32) {
    %c0_i32 = arith.constant 0 : i32
    %c0_i32_0 = arith.constant 0 : i32
    %c0_i32_1 = arith.constant 0 : i32
    return %c0_i32, %c0_i32_0 : i32, i32
  }
  func.func @transform_3(%arg0: i32) -> (i32, i32, i32) {
    %c0_i32 = arith.constant 0 : i32
    %c0_i32_0 = arith.constant 0 : i32
    %c0_i32_1 = arith.constant 0 : i32
    return %arg0, %c0_i32, %c0_i32_0 : i32, i32, i32
  }
}

</mosaic_0001>

<llo_original>
// kernel: tpu_custom_call.1
$region0: #{tpu_custom_call.1}
  #allocation0 [shape = 'u32[]', space=smem, size = 0x4, offset = 0x4, fixed_abs, tag = 'smem constant byte address 0x4 - core index']
  #allocation1 [shape = 'u32[144,128]{1,0:T(1,128)}', space=vmem, size = 0x12000, scoped, tag = 'internal scratch']
  %s0 = inlined_call_operand.hbm [shape: f32[2,4,256], index: 0, kind: input, shape index: {}]
  %s1 = inlined_call_operand.vmem [shape: f32[1,4], index: 1, kind: input, shape index: {}]
  %s2 = inlined_call_operand.vmem [shape: f32[4,1], index: 2, kind: input, shape index: {}]
  %s3 = inlined_call_operand.hbm [shape: f32[2,4,256], index: 3, kind: output, shape index: {}]
  %s4 = sld [smem:[#allocation0]]
  $region26: #{tpu_custom_call.1} parent=0
    _
  %s6 = ssub.s32 1, %s4
  %s7 = scalar_select 0, %s6, %s4
  $region1: #{tpu_custom_call.1} parent=0
    #allocation2 [shape = 'u8[8192]{0}', space=vmem, size = 0x2000, scoped, tag = 'input window, operand 0, single buffered']
    #allocation3 [shape = 's32[1]{0}', space=sflag, size = 0x4, scoped, tag = 'scoped memory for tpu_custom_call.1']
    #allocation4 [shape = 's32[1]{0}', space=sflag, size = 0x4, scoped, tag = 'scoped memory for tpu_custom_call.1']
    #allocation5 [shape = 'u8[8192]{0}', space=vmem, size = 0x2000, scoped, tag = 'output window, operand 0, single buffered']
    %8 = vsyncpa [#allocation3], 0
    %9 = vsyncpa [#allocation4], 0
    // Predicated region
    $region2: #{tpu_custom_call.1} parent=1 // pred_check
      _
    $region3: #{tpu_custom_call.1} parent=1 // pred_check_branch
      %11 = sbr.rel (0) target = $region5
    $region4: #{tpu_custom_call.1} parent=1 // pred_region
      %s13 = ssub.s32 256, 256
      %14 = vsyncadd [#allocation3], %s13
      %s15 = sshll.u32 [#allocation2], 4
      %s16 = int_to_ptr.vmem [resolvable:$true] %s15
      %21 = dma.hbm_to_vmem [thread:$0]  %s0, 256, %s16, [#allocation3], 128, 128, 8
    $region5: #{tpu_custom_call.1} parent=1 // pred_fallthru
      _
    // Predicated region
    $region6: #{tpu_custom_call.1} parent=1 // pred_check
      _
    $region7: #{tpu_custom_call.1} parent=1 // pred_check_branch
      %23 = sbr.rel (0) target = $region9
    $region8: #{tpu_custom_call.1} parent=1 // pred_region
      _
    $region9: #{tpu_custom_call.1} parent=1 // pred_fallthru
      _
    // Predicated region
    $region10: #{tpu_custom_call.1} parent=1 // pred_check
      _
    $region11: #{tpu_custom_call.1} parent=1 // pred_check_branch
      %25 = sbr.rel (0) target = $region13
    $region12: #{tpu_custom_call.1} parent=1 // pred_region
      _
    $region13: #{tpu_custom_call.1} parent=1 // pred_fallthru
      _
    // Predicated region
    $region14: #{tpu_custom_call.1} parent=1 // pred_check
      _
    $region15: #{tpu_custom_call.1} parent=1 // pred_check_branch
      %27 = sbr.rel (0) target = $region17
    $region16: #{tpu_custom_call.1} parent=1 // pred_region
      %28 = dma.done [#allocation3], 256
    $region17: #{tpu_custom_call.1} parent=1 // pred_fallthru
      _
    %v29 = vld [vmem:[#allocation2] sm:$0xff]
    %v30 = vld [vmem:[#allocation2 + $0x8] sm:$0xff]
    %v31 = vld [vmem:[%s1] sm:$0x1]
    %v32 = vld [vmem:[%s2] sm:$0xf]
    %v35 = vcombine.high %v29, %v29
    %v36 = vcombine.high %v30, %v30
    %vm39 = vcmask 1043456
    %v40 = vsel %vm39, %v29, -inf
    %v41 = vsel %vm39, %v35, -inf
    %v42 = vmax.f32 %v40, %v41
    %43 = vmax.xlane.f32.xlu0 %v42
    %v44 = vpop.xlane.xlu0 %43
    %v45 = vsel %vm39, %v30, -inf
    %v46 = vsel %vm39, %v36, -inf
    %v47 = vmax.f32 %v45, %v46
    %48 = vmax.xlane.f32.xlu0 %v47
    %v49 = vpop.xlane.xlu0 %48
    %v50 = vsel %vm39, %v29, 0.0
    %v51 = vsel %vm39, %v35, 0.0
    %v52 = vadd.f32 %v50, %v51
    %53 = vadd.xlane.f32.xlu0 %v52
    %v54 = vpop.xlane.xlu0 %53
    %v55 = vsel %vm39, %v30, 0.0
    %v56 = vsel %vm39, %v36, 0.0
    %v57 = vadd.f32 %v55, %v56
    %58 = vadd.xlane.f32.xlu0 %v57
    %v59 = vpop.xlane.xlu0 %58
    %v60 = vrcp.pop 256.0
    %v61 = vmul.f32 %v54, %v60
    %v62 = vmul.f32 %v59, %v60
    %v65 = vlaneseq
    %v66 = vand.u32 %v65, 127
    %v67 = vlaneseq
    %v68 = vshrl.u32 %v67, 7
    %v69 = vsub.s32 %v66, %v68
    %v70 = vrot.slane %v44, %v69
    %v71 = vlaneseq
    %v72 = vshrl.u32 %v71, 7
    %v73 = vsub.s32 %v66, %v72
    %v74 = vrot.slane %v49, %v73
    %vm75 = vcmask 1041409
    %v76 = vsel %vm75, %v74, %v70
    %v80 = vlaneseq
    %v81 = vshrl.u32 %v80, 7
    %v82 = vsub.s32 %v66, %v81
    %v83 = vrot.slane %v61, %v82
    %v84 = vlaneseq
    %v85 = vshrl.u32 %v84, 7
    %v86 = vsub.s32 %v66, %v85
    %v87 = vrot.slane %v62, %v86
    %vm88 = vcmask 1043459
    %v89 = vsel %vm88, %v87, %v83
    %vm91 = vcmask 1041408
    %v92 = vsel %vm91, %v76, %v89
    %v94 = vlaneseq
    %v95 = vshrl.u32 %v94, 7
    %v96 = vsub.s32 0, %v95
    %v97 = vrot.slane %v31, %v96
    %v99 = vmul.f32 %v92, %v97
    %vm100 = vcmask 27648
    %v101 = vsel %vm100, %v99, 0.0
    %102 = vadd.xlane.f32.xlu0 %v101
    %v103 = vpop.xlane.xlu0 %102
    %v104 = vmax.f32 %v103, 0.0
    %vm105 = vcmask 7168
    %v107 = vsel %vm105, %v104, 0
    %v110 = vsel %vm105, %v32, 0
    %112 = vmatprep.subr.mxu0 0.0
    %113 = vmatpush1.xpose.msra.mxu0 %v110
    %114 = vmatprep.subr.mxu0 0.0
    %115 = vmatpush1.xpose.msra.mxu0 0.0
    %116 = vmatprep.subr.mxu0 0.0
    %117 = vmatpush1.xpose.msra.mxu0 0.0
    %118 = vmatprep.subr.mxu0 0.0
    %119 = vmatpush1.xpose.msra.mxu0 0.0
    %120 = vmatprep.subr.mxu0 0.0
    %121 = vmatpush1.xpose.msra.mxu0 0.0
    %122 = vmatprep.subr.mxu0 0.0
    %123 = vmatpush1.xpose.msra.mxu0 0.0
    %124 = vmatprep.subr.mxu0 0.0
    %125 = vmatpush1.xpose.msra.mxu0 0.0
    %126 = vmatprep.subr.mxu0 0.0
    %127 = vmatpush1.xpose.msra.mxu0 0.0
    %128 = vmatprep.subr.mxu0 0.0
    %129 = vmatpush1.xpose.msra.mxu0 0.0
    %130 = vmatprep.subr.mxu0 0.0
    %131 = vmatpush1.xpose.msra.mxu0 0.0
    %132 = vmatprep.subr.mxu0 0.0
    %133 = vmatpush1.xpose.msra.mxu0 0.0
    %134 = vmatprep.subr.mxu0 0.0
    %135 = vmatpush1.xpose.msra.mxu0 0.0
    %136 = vmatprep.subr.mxu0 0.0
    %137 = vmatpush1.xpose.msra.mxu0 0.0
    %138 = vmatprep.subr.mxu0 0.0
    %139 = vmatpush1.xpose.msra.mxu0 0.0
    %140 = vmatprep.subr.mxu0 0.0
    %141 = vmatpush1.xpose.msra.mxu0 0.0
    %142 = vmatprep.subr.mxu0 0.0
    %143 = vmatpush1.xpose.msra.mxu0 0.0
    %144 = vmatprep.subr.mxu0 0.0
    %145 = vmatpush1.xpose.msra.mxu0 0.0
    %146 = vmatprep.subr.mxu0 0.0
    %147 = vmatpush1.xpose.msra.mxu0 0.0
    %148 = vmatprep.subr.mxu0 0.0
    %149 = vmatpush1.xpose.msra.mxu0 0.0
    %150 = vmatprep.subr.mxu0 0.0
    %151 = vmatpush1.xpose.msra.mxu0 0.0
    %152 = vmatprep.subr.mxu0 0.0
    %153 = vmatpush1.xpose.msra.mxu0 0.0
    %154 = vmatprep.subr.mxu0 0.0
    %155 = vmatpush1.xpose.msra.mxu0 0.0
    %156 = vmatprep.subr.mxu0 0.0
    %157 = vmatpush1.xpose.msra.mxu0 0.0
    %158 = vmatprep.subr.mxu0 0.0
    %159 = vmatpush1.xpose.msra.mxu0 0.0
    %160 = vmatprep.subr.mxu0 0.0
    %161 = vmatpush1.xpose.msra.mxu0 0.0
    %162 = vmatprep.subr.mxu0 0.0
    %163 = vmatpush1.xpose.msra.mxu0 0.0
    %164 = vmatprep.subr.mxu0 0.0
    %165 = vmatpush1.xpose.msra.mxu0 0.0
    %166 = vmatprep.subr.mxu0 0.0
    %167 = vmatpush1.xpose.msra.mxu0 0.0
    %168 = vmatprep.subr.mxu0 0.0
    %169 = vmatpush1.xpose.msra.mxu0 0.0
    %170 = vmatprep.subr.mxu0 0.0
    %171 = vmatpush1.xpose.msra.mxu0 0.0
    %172 = vmatprep.subr.mxu0 0.0
    %173 = vmatpush1.xpose.msra.mxu0 0.0
    %174 = vmatprep.subr.mxu0 0.0
    %175 = vmatpush1.xpose.msra.mxu0 0.0
    %176 = vmatprep.mubr.f32.mxu0 0.0
    %177 = vmatmul.mubr.f32.gmra.mrb[0].mxu0 %v107
    %v178 = vpop.f32.mrb[0].mxu0
    %v179 = vadd.f32 0.0, %v178
    %v180 = vpop.f32.mrb[0].mxu0
    %181 = vdwg.mxu0
    %v183 = vrot.slane %v179, 2
    %v185 = vadd.f32 %v179, %v183
    %v186 = vxor.u32 %v185, 2147483648
    %v187 = vmul.f32 %v186, 1.442695
    %v188 = vpow.pop %v187
    %v189 = vadd.f32 %v188, 1.0
    %v190 = vrcp.pop %v189
    %v191 = vmul.f32 1.0, %v190
    %v192 = vlaneseq
    %v193 = vshrl.u32 %v192, 7
    %v194 = vsub.s32 0, %v193
    %v195 = vrot.slane %v191, %v194
    %197 = vbcast.lane.b32.xlu0 %v195, 256
    %v198 = vpop.permute.xlu0 %197
    %v199 = vlaneseq
    %v200 = vshrl.u32 %v199, 7
    %v201 = vsub.s32 1, %v200
    %v202 = vrot.slane %v191, %v201
    %204 = vbcast.lane.b32.xlu0 %v202, 256
    %v205 = vpop.permute.xlu0 %204
    %v209 = vunpack.c.l.s4 839922192
    %v210 = vunpack.c.0.s8 %v209
    %v211 = vlaneseq
    %v212 = vshrl.u32 %v211, 7
    %v213 = vsub.s32 %v210, %v212
    %v214 = vrot.slane %v198, %v213
    %v216 = vunpack.c.l.s4 839922192
    %v217 = vunpack.c.0.s8 %v216
    %v218 = vlaneseq
    %v219 = vshrl.u32 %v218, 7
    %v220 = vsub.s32 %v217, %v219
    %v221 = vrot.slane %v205, %v220
    %v224 = vmul.f32 %v29, %v214
    %v225 = vmul.f32 %v30, %v221
    %226 = vst [vmem:[#allocation5] sm:$0xff] %v224
    %227 = vst [vmem:[#allocation5 + $0x8] sm:$0xff] %v225
    // Predicated region
    $region18: #{tpu_custom_call.1} parent=1 // pred_check
      _
    $region19: #{tpu_custom_call.1} parent=1 // pred_check_branch
      %229 = sbr.rel (0) target = $region21
    $region20: #{tpu_custom_call.1} parent=1 // pred_region
      %s231 = ssub.s32 256, 256
      %232 = vsyncadd [#allocation4], %s231
      %s233 = sshll.u32 [#allocation5], 4
      %s234 = int_to_ptr.vmem [resolvable:$true] %s233
      %239 = dma.vmem_to_hbm [thread:$0]  %s234, 256, %s3, [#allocation4], 128, 128, 8
    $region21: #{tpu_custom_call.1} parent=1 // pred_fallthru
      _
    // Predicated region
    $region22: #{tpu_custom_call.1} parent=1 // pred_check
      _
    $region23: #{tpu_custom_call.1} parent=1 // pred_check_branch
      %241 = sbr.rel (0) target = $region25
    $region24: #{tpu_custom_call.1} parent=1 // pred_region
      %242 = dma.done [#allocation4], 256
    $region25: #{tpu_custom_call.1} parent=1 // pred_fallthru
      _
    %243 = vsyncpa [#allocation3], 1
    %244 = vsyncpa [#allocation4], 1

</llo_original>
